<compile_context>
chip_gen: v6e
topology: v6e:2x2x1
jax: 0.10.0
libtpu: 0.0.40
codegen_flags: <defaults>
</compile_context>

<pallas_src>
import jax
import jax.numpy as jnp
from jax.experimental import pallas as pl
from jax.experimental.pallas import tpu as pltpu

# Fixed grayscale coefficients (module __init__ constants, no trainable params).
_R = 0.2126
_G = 0.7152
_B = 0.0722

_LANE = 128
_SUBLANE = 8
_STEP_BYTES = 16 * 1024 * 1024       # max HBM bytes (in + out) per grid step
_MIN_STEP_BYTES = 512 * 1024         # don't split work below this per step
_MIN_STEPS = 4                       # aim for >= 4 grid steps when work allows
_VMEM_LIMIT_BYTES = 48 * 1024 * 1024


def _round_up(x: int, m: int) -> int:
    return ((x + m - 1) // m) * m


def _step_budget(total_bytes: int) -> int:
    # Big enough to amortize the ~0.35us per-step pipeline overhead, small
    # enough to double-buffer comfortably, and split into >= _MIN_STEPS steps
    # whenever there is enough total work.
    return min(_STEP_BYTES, max(_MIN_STEP_BYTES, total_bytes // _MIN_STEPS))


def _gray4d_kernel(x_ref, o_ref):
    # x_ref: (TB, 3, TS, 128); o_ref: (TB, 1, TS, 128).
    # Channel dim is an outer (untiled) axis -> these slices are free views.
    r = x_ref[:, 0, :, :].astype(jnp.float32)
    g = x_ref[:, 1, :, :].astype(jnp.float32)
    b = x_ref[:, 2, :, :].astype(jnp.float32)
    o_ref[:, 0, :, :] = (r * _R + g * _G + b * _B).astype(o_ref.dtype)


def _gray3d_kernel(x_ref, o_ref):
    # Fallback layout: x_ref (TB, 3, TN); o_ref (TB, 1, TN).
    r = x_ref[:, 0, :].astype(jnp.float32)
    g = x_ref[:, 1, :].astype(jnp.float32)
    b = x_ref[:, 2, :].astype(jnp.float32)
    o_ref[:, 0, :] = (r * _R + g * _G + b * _B).astype(o_ref.dtype)


def _grayscale_lane_aligned(x4: jax.Array) -> jax.Array:
    """Main path: x4 is (B, 3, ROWS, 128); returns (B, 1, ROWS, 128)."""
    B, _, ROWS, _ = x4.shape
    itemsize = jnp.dtype(x4.dtype).itemsize
    per_image_bytes = 4 * ROWS * _LANE * itemsize     # 3 channels in + 1 out
    step_bytes = _step_budget(B * per_image_bytes)

    if per_image_bytes >= step_bytes:
        # Large images: one image per step, split rows into balanced chunks.
        TB = 1
        n_chunks = pl.cdiv(per_image_bytes, step_bytes)
        TS = min(_round_up(pl.cdiv(ROWS, n_chunks), _SUBLANE), ROWS)
    else:
        # Small images: whole image per step, block over batch instead.
        TS = ROWS
        TB = max(1, min(B, step_bytes // per_image_bytes))
        TB = pl.cdiv(B, pl.cdiv(B, TB))               # balance batch chunks
    grid = (pl.cdiv(B, TB), pl.cdiv(ROWS, TS))

    cost = pl.CostEstimate(
        flops=5 * B * ROWS * _LANE,
        transcendentals=0,
        bytes_accessed=B * per_image_bytes,
    )
    return pl.pallas_call(
        _gray4d_kernel,
        out_shape=jax.ShapeDtypeStruct((B, 1, ROWS, _LANE), x4.dtype),
        grid_spec=pltpu.PrefetchScalarGridSpec(
            num_scalar_prefetch=0,
            grid=grid,
            in_specs=[
                pl.BlockSpec((TB, 3, TS, _LANE), lambda bi, ri: (bi, 0, ri, 0)),
            ],
            out_specs=pl.BlockSpec((TB, 1, TS, _LANE),
                                   lambda bi, ri: (bi, 0, ri, 0)),
        ),
        compiler_params=pltpu.CompilerParams(
            dimension_semantics=("parallel", "parallel"),
            vmem_limit_bytes=_VMEM_LIMIT_BYTES,
        ),
        cost_estimate=cost,
    )(x4)


def _grayscale_ragged(x3: jax.Array) -> jax.Array:
    """Fallback path (H*W not a multiple of 128): x3 is (B, 3, HW)."""
    B, _, HW = x3.shape
    itemsize = jnp.dtype(x3.dtype).itemsize
    # Here the size-3 / size-1 channel dims sit in the sublane position and get
    # padded to the dtype's sublane tile in VMEM -> budget on padded footprint.
    sub = _SUBLANE * max(1, 4 // itemsize)            # 8 (f32) / 16 (bf16) / 32 (i8)
    per_image_vmem = 2 * sub * HW * itemsize          # padded input + output
    step_vmem = _step_budget(B * per_image_vmem)

    if per_image_vmem >= step_vmem:
        TB = 1
        n_chunks = pl.cdiv(per_image_vmem, step_vmem)
        TN = min(_round_up(pl.cdiv(HW, n_chunks), _LANE), HW)
    else:
        TN = HW
        TB = max(1, min(B, step_vmem // per_image_vmem))
        TB = pl.cdiv(B, pl.cdiv(B, TB))
    grid = (pl.cdiv(B, TB), pl.cdiv(HW, TN))

    cost = pl.CostEstimate(
        flops=5 * B * HW,
        transcendentals=0,
        bytes_accessed=4 * B * HW * itemsize,
    )
    return pl.pallas_call(
        _gray3d_kernel,
        out_shape=jax.ShapeDtypeStruct((B, 1, HW), x3.dtype),
        grid_spec=pltpu.PrefetchScalarGridSpec(
            num_scalar_prefetch=0,
            grid=grid,
            in_specs=[pl.BlockSpec((TB, 3, TN), lambda bi, ni: (bi, 0, ni))],
            out_specs=pl.BlockSpec((TB, 1, TN), lambda bi, ni: (bi, 0, ni)),
        ),
        compiler_params=pltpu.CompilerParams(
            dimension_semantics=("parallel", "parallel"),
            vmem_limit_bytes=_VMEM_LIMIT_BYTES,
        ),
        cost_estimate=cost,
    )(x3)


def grayscale(inputs: jax.Array) -> jax.Array:
    """Convert a batch of RGB images [B, 3, H, W] to grayscale [B, 1, H, W]."""
    B, C, H, W = inputs.shape
    assert C == 3, "GrayScale expects 3 input channels (RGB)"
    HW = H * W
    if HW % _LANE == 0:
        out = _grayscale_lane_aligned(inputs.reshape(B, 3, HW // _LANE, _LANE))
    else:
        out = _grayscale_ragged(inputs.reshape(B, 3, HW))
    return out.reshape(B, 1, H, W)


if __name__ == "__main__":
    k1, k2 = jax.random.split(jax.random.PRNGKey(0))

    # Lane-aligned path (H*W multiple of 128).
    x = jax.random.uniform(k1, (2, 3, 16, 16), dtype=jnp.float32)
    out = grayscale(x)
    jax.block_until_ready(out)
    ref = (x[:, 0] * _R + x[:, 1] * _G + x[:, 2] * _B)[:, None]
    assert out.shape == (2, 1, 16, 16), out.shape
    assert jnp.allclose(out, ref, atol=1e-6), "mismatch vs reference (aligned path)"

    # Ragged fallback path (H*W not a multiple of 128) — no pad / slice traffic.
    y = jax.random.uniform(k2, (2, 3, 10, 10), dtype=jnp.float32)
    out2 = grayscale(y)
    jax.block_until_ready(out2)
    ref2 = (y[:, 0] * _R + y[:, 1] * _G + y[:, 2] * _B)[:, None]
    assert out2.shape == (2, 1, 10, 10), out2.shape
    assert jnp.allclose(out2, ref2, atol=1e-6), "mismatch vs reference (ragged path)"

    print("KERNEL_OK")
</pallas_src>

<mosaic_0001>
module attributes {stable_mosaic.version = 11 : i64} {
  func.func @_gray4d_kernel(%arg0: i32, %arg1: i32, %arg2: memref<2x3x2x128xf32, #tpu.memory_space<vmem>>, %arg3: memref<2x1x2x128xf32, #tpu.memory_space<vmem>>) attributes {dimension_semantics = [#tpu.dimension_semantics<parallel>, #tpu.dimension_semantics<parallel>], iteration_bounds = array<i64: 1, 1>, scalar_prefetch = 0 : i64, scratch_operands = 0 : i64, tpu.core_type = #tpu.core_type<tc>, window_params = [{transform_indices = @transform_0, window_bounds = array<i64: 2, 3, 2, 128>}, {transform_indices = @transform_1, window_bounds = array<i64: 2, 1, 2, 128>}]} {
    %c0 = arith.constant 0 : index
    %c0_0 = arith.constant 0 : index
    %c0_1 = arith.constant 0 : index
    %c0_2 = arith.constant 0 : index
    %0 = vector.load %arg2[%c0, %c0_0, %c0_1, %c0_2] : memref<2x3x2x128xf32, #tpu.memory_space<vmem>>, vector<2x1x2x128xf32>
    %1 = vector.shape_cast %0 : vector<2x1x2x128xf32> to vector<2x2x128xf32>
    %c0_3 = arith.constant 0 : index
    %c1 = arith.constant 1 : index
    %c0_4 = arith.constant 0 : index
    %c0_5 = arith.constant 0 : index
    %2 = vector.load %arg2[%c0_3, %c1, %c0_4, %c0_5] : memref<2x3x2x128xf32, #tpu.memory_space<vmem>>, vector<2x1x2x128xf32>
    %3 = vector.shape_cast %2 : vector<2x1x2x128xf32> to vector<2x2x128xf32>
    %c0_6 = arith.constant 0 : index
    %c2 = arith.constant 2 : index
    %c0_7 = arith.constant 0 : index
    %c0_8 = arith.constant 0 : index
    %4 = vector.load %arg2[%c0_6, %c2, %c0_7, %c0_8] : memref<2x3x2x128xf32, #tpu.memory_space<vmem>>, vector<2x1x2x128xf32>
    %5 = vector.shape_cast %4 : vector<2x1x2x128xf32> to vector<2x2x128xf32>
    %cst = arith.constant 2.126000e-01 : f32
    %6 = vector.broadcast %cst : f32 to vector<2x2x128xf32>
    %7 = arith.mulf %1, %6 : vector<2x2x128xf32>
    %cst_9 = arith.constant 7.152000e-01 : f32
    %8 = vector.broadcast %cst_9 : f32 to vector<2x2x128xf32>
    %9 = arith.mulf %3, %8 : vector<2x2x128xf32>
    %10 = arith.addf %7, %9 : vector<2x2x128xf32>
    %cst_10 = arith.constant 7.220000e-02 : f32
    %11 = vector.broadcast %cst_10 : f32 to vector<2x2x128xf32>
    %12 = arith.mulf %5, %11 : vector<2x2x128xf32>
    %13 = arith.addf %10, %12 : vector<2x2x128xf32>
    %c0_11 = arith.constant 0 : index
    %c0_12 = arith.constant 0 : index
    %c0_13 = arith.constant 0 : index
    %c0_14 = arith.constant 0 : index
    %14 = vector.load %arg3[%c0_11, %c0_12, %c0_13, %c0_14] : memref<2x1x2x128xf32, #tpu.memory_space<vmem>>, vector<2x1x2x128xf32>
    %15 = vector.shape_cast %14 : vector<2x1x2x128xf32> to vector<2x2x128xf32>
    %16 = vector.shape_cast %13 : vector<2x2x128xf32> to vector<2x1x2x128xf32>
    tpu.vector_store %arg3[%c0_11, %c0_12, %c0_13, %c0_14], %16 {strides = array<i32>} : memref<2x1x2x128xf32, #tpu.memory_space<vmem>>, vector<2x1x2x128xf32>,
    return
  }
  func.func @transform_0(%arg0: i32, %arg1: i32) -> (i32, i32, i32, i32) {
    %c0_i32 = arith.constant 0 : i32
    %c0_i32_0 = arith.constant 0 : i32
    %c0_i32_1 = arith.constant 0 : i32
    return %arg0, %c0_i32, %arg1, %c0_i32_0 : i32, i32, i32, i32
  }
  func.func @transform_1(%arg0: i32, %arg1: i32) -> (i32, i32, i32, i32) {
    %c0_i32 = arith.constant 0 : i32
    %c0_i32_0 = arith.constant 0 : i32
    %c0_i32_1 = arith.constant 0 : i32
    return %arg0, %c0_i32, %arg1, %c0_i32_0 : i32, i32, i32, i32
  }
}

</mosaic_0001>

<llo_original>
// kernel: tpu_custom_call.1
$region0: #{tpu_custom_call.1}
  #allocation0 [shape = 'u32[]', space=smem, size = 0x4, offset = 0x4, fixed_abs, tag = 'smem constant byte address 0x4 - core index']
  #allocation1 [shape = 'u32[144,128]{1,0:T(1,128)}', space=vmem, size = 0x12000, scoped, tag = 'internal scratch']
  %s0 = inlined_call_operand.hbm [shape: f32[2,3,2,128], index: 0, kind: input, shape index: {}]
  %s1 = inlined_call_operand.hbm [shape: f32[2,1,2,128], index: 1, kind: output, shape index: {}]
  %s2 = sld [smem:[#allocation0]]
  $region18: #{tpu_custom_call.1} parent=0
    _
  %s4 = ssub.s32 1, %s2
  %s5 = scalar_select 0, %s4, %s2
  $region1: #{tpu_custom_call.1} parent=0
    #allocation2 [shape = 'u8[6144]{0}', space=vmem, size = 0x1800, scoped, tag = 'input window, operand 0, single buffered']
    #allocation3 [shape = 's32[1]{0}', space=sflag, size = 0x4, scoped, tag = 'scoped memory for tpu_custom_call.1']
    #allocation4 [shape = 's32[1]{0}', space=sflag, size = 0x4, scoped, tag = 'scoped memory for tpu_custom_call.1']
    #allocation5 [shape = 'u8[2048]{0}', space=vmem, size = 0x800, scoped, tag = 'output window, operand 0, single buffered']
    %6 = vsyncpa [#allocation3], 0
    %7 = vsyncpa [#allocation4], 0
    // Predicated region
    $region2: #{tpu_custom_call.1} parent=1 // pred_check
      _
    $region3: #{tpu_custom_call.1} parent=1 // pred_check_branch
      %9 = sbr.rel (0) target = $region5
    $region4: #{tpu_custom_call.1} parent=1 // pred_region
      %s11 = ssub.s32 192, 192
      %12 = vsyncadd [#allocation3], %s11
      %s13 = sshll.u32 [#allocation2], 4
      %s14 = int_to_ptr.vmem [resolvable:$true] %s13
      %19 = dma.hbm_to_vmem [thread:$0]  %s0, 192, %s14, [#allocation3], 32, 32, 2
    $region5: #{tpu_custom_call.1} parent=1 // pred_fallthru
      _
    // Predicated region
    $region6: #{tpu_custom_call.1} parent=1 // pred_check
      _
    $region7: #{tpu_custom_call.1} parent=1 // pred_check_branch
      %21 = sbr.rel (0) target = $region9
    $region8: #{tpu_custom_call.1} parent=1 // pred_region
      %22 = dma.done [#allocation3], 192
    $region9: #{tpu_custom_call.1} parent=1 // pred_fallthru
      _
    %v23 = vld [vmem:[#allocation2] sm:$0x3]
    %v24 = vld [vmem:[#allocation2 + $0x6] sm:$0x3]
    %s25 = scalar_lea.vmem [#allocation2], 2
    %v26 = vld [vmem:[%s25] sm:$0x3]
    %v27 = vld [vmem:[%s25 + $0x6] sm:$0x3]
    %s28 = scalar_lea.vmem [#allocation2], 4
    %v29 = vld [vmem:[%s28] sm:$0x3]
    %v30 = vld [vmem:[%s28 + $0x6] sm:$0x3]
    %v31 = vmul.f32 %v23, 0.2126
    %v32 = vmul.f32 %v24, 0.2126
    %v33 = vmul.f32 %v26, 0.7152
    %v34 = vmul.f32 %v27, 0.7152
    %v35 = vadd.f32 %v31, %v33
    %v36 = vadd.f32 %v32, %v34
    %v37 = vmul.f32 %v29, 0.0722
    %v38 = vmul.f32 %v30, 0.0722
    %v39 = vadd.f32 %v35, %v37
    %v40 = vadd.f32 %v36, %v38
    %41 = vst [vmem:[#allocation5] sm:$0x3] %v39
    %42 = vst [vmem:[#allocation5 + $0x2] sm:$0x3] %v40
    // Predicated region
    $region10: #{tpu_custom_call.1} parent=1 // pred_check
      _
    $region11: #{tpu_custom_call.1} parent=1 // pred_check_branch
      %44 = sbr.rel (0) target = $region13
    $region12: #{tpu_custom_call.1} parent=1 // pred_region
      %s46 = ssub.s32 64, 64
      %47 = vsyncadd [#allocation4], %s46
      %s48 = sshll.u32 [#allocation5], 4
      %s49 = int_to_ptr.vmem [resolvable:$true] %s48
      %54 = dma.vmem_to_hbm [thread:$0]  %s49, 64, %s1, [#allocation4], 32, 32, 2
    $region13: #{tpu_custom_call.1} parent=1 // pred_fallthru
      _
    // Predicated region
    $region14: #{tpu_custom_call.1} parent=1 // pred_check
      _
    $region15: #{tpu_custom_call.1} parent=1 // pred_check_branch
      %56 = sbr.rel (0) target = $region17
    $region16: #{tpu_custom_call.1} parent=1 // pred_region
      %57 = dma.done [#allocation4], 64
    $region17: #{tpu_custom_call.1} parent=1 // pred_fallthru
      _
    %58 = vsyncpa [#allocation3], 1
    %59 = vsyncpa [#allocation4], 1

</llo_original>
